<compile_context>
chip_gen: v7x
topology: tpu7x:2x2x1
jax: 0.10.0
libtpu: 0.0.40
codegen_flags: <defaults>
</compile_context>

<pallas_src>
import math
import functools

import jax
import jax.numpy as jnp
from jax.experimental import pallas as pl
from jax.experimental.pallas import tpu as pltpu

OMEGA = 10.0
EPSILON = 2.0
LANES = 128
BLOCK_BYTES = 4 * 1024 * 1024        # per-input block byte budget (4 MiB)
VMEM_LIMIT_BYTES = 40 * 1024 * 1024  # 16 MiB of input buffers + headroom


def _round_up(x, m):
    return ((x + m - 1) // m) * m


def _sublane_multiple(itemsize):
    # Sub-32-bit dtypes pack along sublanes: (8,128) f32, (16,128) bf16/f16,
    # (32,128) int8/fp8.
    return {4: 8, 2: 16, 1: 32}.get(int(itemsize), 8)


def _wing_loss_kernel(p_ref, t_ref, out_ref, *, omega, inv_eps, c_const,
                      rows_total, tile_rows, need_mask):
    # Upcast after the load: inputs may be bf16/fp16, math is always f32.
    d = jnp.abs(t_ref[...].astype(jnp.float32) - p_ref[...].astype(jnp.float32))
    loss = jnp.where(d < omega, omega * jnp.log1p(d * inv_eps), d - c_const)
    if need_mask:
        # Last grid block may extend past the array; zero out garbage rows.
        # Mask AFTER the elementwise compute and BEFORE the reduction so any
        # NaN/Inf in garbage rows cannot propagate through the select.
        i = pl.program_id(0)
        row = jax.lax.broadcasted_iota(jnp.int32, loss.shape, 0)
        loss = jnp.where(row + i * tile_rows < rows_total, loss, 0.0)
    # Sublane-only reduction; independent lane-dense (1, 128) partial per step.
    out_ref[...] = jnp.sum(loss, axis=0, keepdims=True)


def _wing_pointwise(pred_f32, target_f32, omega, inv_eps, c_const):
    d = jnp.abs(target_f32 - pred_f32)
    return jnp.where(d < omega, omega * jnp.log1p(d * inv_eps), d - c_const)


def wing_loss(pred, target, omega=OMEGA, epsilon=EPSILON):
    assert pred.shape == target.shape
    n = pred.size
    omega = float(omega)
    inv_eps = 1.0 / float(epsilon)
    c_const = omega - omega * math.log(1.0 + omega / epsilon)

    itemsize = jnp.dtype(pred.dtype).itemsize
    mult = _sublane_multiple(itemsize)

    p_flat = pred.reshape(-1)
    t_flat = target.reshape(-1)

    rows = n // LANES          # full 128-lane rows handled by the kernel
    n_main = rows * LANES
    rem = n - n_main

    total = jnp.float32(0.0)
    tail_start = 0

    if rows >= mult:  # kernel path for the bulk
        if rem:
            # n not a multiple of 128 (rare): prefix view for the kernel.
            # allow_input_fusion below lets XLA fuse this slice+reshape into
            # the kernel operand instead of materializing an HBM copy.
            p_main, t_main = p_flat[:n_main], t_flat[:n_main]
        else:
            p_main, t_main = p_flat, t_flat
        p2d = p_main.reshape(rows, LANES)   # contiguous reshape: no copy
        t2d = t_main.reshape(rows, LANES)

        # Byte-budgeted tile, rounded to the dtype's sublane-packing multiple.
        budget_rows = max(mult, (BLOCK_BYTES // (LANES * itemsize)) // mult * mult)
        aligned_rows = (rows // mult) * mult
        # Keep num_blocks >= 2 whenever possible so v7x can shard the
        # "parallel" grid axis across both TensorCores.
        half_rows = _round_up(pl.cdiv(rows, 2), mult)
        tile_rows = min(budget_rows, half_rows, aligned_rows)
        num_blocks = pl.cdiv(rows, tile_rows)
        need_mask = (rows % tile_rows) != 0

        kernel = functools.partial(
            _wing_loss_kernel, omega=omega, inv_eps=inv_eps, c_const=c_const,
            rows_total=rows, tile_rows=tile_rows, need_mask=need_mask)

        in_bytes = 2 * n_main * itemsize
        partials = pl.pallas_call(
            kernel,
            out_shape=jax.ShapeDtypeStruct((1, num_blocks * LANES), jnp.float32),
            grid=(num_blocks,),
            in_specs=[
                pl.BlockSpec((tile_rows, LANES), lambda i: (i, 0)),
                pl.BlockSpec((tile_rows, LANES), lambda i: (i, 0)),
            ],
            out_specs=pl.BlockSpec((1, LANES), lambda i: (0, i)),
            compiler_params=pltpu.CompilerParams(
                dimension_semantics=("parallel",),
                vmem_limit_bytes=VMEM_LIMIT_BYTES,
                allow_input_fusion=[True, True] if rem else None),
            cost_estimate=pl.CostEstimate(
                flops=7 * n_main,
                transcendentals=n_main,
                bytes_accessed=in_bytes + num_blocks * LANES * 4),
        )(p2d, t2d)
        total = total + jnp.sum(partials)
        tail_start = n_main

    if tail_start < n:
        # Flat remainder (< 128 elems) or tiny inputs: plain jnp.
        p_tail = p_flat[tail_start:].astype(jnp.float32)
        t_tail = t_flat[tail_start:].astype(jnp.float32)
        total = total + jnp.sum(
            _wing_pointwise(p_tail, t_tail, omega, inv_eps, c_const))

    return (total / n).astype(jnp.float32)


def wing_loss_ref(pred, target, omega=OMEGA, epsilon=EPSILON):
    d = jnp.abs(target.astype(jnp.float32) - pred.astype(jnp.float32))
    c = omega - omega * math.log(1.0 + omega / epsilon)
    loss = jnp.where(d < omega, omega * jnp.log1p(d / epsilon), d - c)
    return jnp.sum(loss) / d.size


if __name__ == "__main__":
    key = jax.random.PRNGKey(0)

    def check(shape, k, dtype=jnp.float32, tol=1e-5):
        k1, k2 = jax.random.split(k)
        # Scale so both wing-loss branches (|d| < omega and |d| >= omega) occur.
        pred = (jax.random.normal(k1, shape, dtype=jnp.float32) * 8.0).astype(dtype)
        target = (jax.random.normal(k2, shape, dtype=jnp.float32) * 8.0).astype(dtype)
        out = jax.block_until_ready(wing_loss(pred, target))
        ref = jax.block_until_ready(wing_loss_ref(pred, target))
        assert jnp.allclose(out, ref, rtol=tol, atol=tol), (shape, dtype, out, ref)

    keys = jax.random.split(key, 6)
    # Small shapes consistent with a segmentation regression head (N, C, H, W).
    check((2, 4, 16, 16), keys[0])                      # exact fit, 2 blocks
    check((2, 4, 16, 20), keys[1])                      # masked partial last block
    check((2, 4, 13, 13), keys[2])                      # mask + <128-elem remainder (slice path)
    check((4, 4, 128, 144), keys[3], tol=1e-4)          # multi-block, larger input
    check((2, 4, 16, 20), keys[4], dtype=jnp.bfloat16)  # bf16 passthrough, (16,128) tiles
    check((3, 5), keys[5])                              # tiny: pure-jnp fallback

    print("KERNEL_OK")
</pallas_src>

<mosaic_0001>
module attributes {stable_mosaic.version = 11 : i64} {
  func.func @_wing_loss_kernel(%arg0: i32, %arg1: memref<8x128xf32, #tpu.memory_space<vmem>>, %arg2: memref<8x128xf32, #tpu.memory_space<vmem>>, %arg3: memref<1x128xf32, #tpu.memory_space<vmem>>) attributes {dimension_semantics = [#tpu.dimension_semantics<parallel>], iteration_bounds = array<i64: 2>, scalar_prefetch = 0 : i64, scratch_operands = 0 : i64, tpu.core_type = #tpu.core_type<tc>, window_params = [{transform_indices = @transform_0, window_bounds = array<i64: 8, 128>}, {transform_indices = @transform_1, window_bounds = array<i64: 8, 128>}, {transform_indices = @transform_2, window_bounds = array<i64: 1, 128>}]} {
    %c0 = arith.constant 0 : index
    %c0_0 = arith.constant 0 : index
    %0 = vector.load %arg2[%c0, %c0_0] : memref<8x128xf32, #tpu.memory_space<vmem>>, vector<8x128xf32>
    %c0_1 = arith.constant 0 : index
    %c0_2 = arith.constant 0 : index
    %1 = vector.load %arg1[%c0_1, %c0_2] : memref<8x128xf32, #tpu.memory_space<vmem>>, vector<8x128xf32>
    %2 = arith.subf %0, %1 : vector<8x128xf32>
    %3 = math.absf %2 : vector<8x128xf32>
    %cst = arith.constant 1.000000e+01 : f32
    %4 = vector.broadcast %cst : f32 to vector<8x128xf32>
    %5 = arith.cmpf olt, %3, %4 : vector<8x128xf32>
    %cst_3 = arith.constant 5.000000e-01 : f32
    %6 = vector.broadcast %cst_3 : f32 to vector<8x128xf32>
    %7 = arith.mulf %3, %6 : vector<8x128xf32>
    %8 = math.log1p %7 : vector<8x128xf32>
    %cst_4 = arith.constant 1.000000e+01 : f32
    %9 = vector.broadcast %cst_4 : f32 to vector<8x128xf32>
    %10 = arith.mulf %9, %8 : vector<8x128xf32>
    %cst_5 = arith.constant -7.9175949 : f32
    %11 = vector.broadcast %cst_5 : f32 to vector<8x128xf32>
    %12 = arith.subf %3, %11 : vector<8x128xf32>
    %13 = arith.select %5, %10, %12 : vector<8x128xi1>, vector<8x128xf32>
    %cst_6 = arith.constant dense<0.000000e+00> : vector<128xf32>
    %14 = vector.multi_reduction <add>, %13, %cst_6 [0] : vector<8x128xf32> to vector<128xf32>
    %15 = vector.shape_cast %14 : vector<128xf32> to vector<1x128xf32>
    %c0_7 = arith.constant 0 : index
    %c0_8 = arith.constant 0 : index
    %16 = vector.load %arg3[%c0_7, %c0_8] : memref<1x128xf32, #tpu.memory_space<vmem>>, vector<1x128xf32>
    tpu.vector_store %arg3[%c0_7, %c0_8], %15 {strides = array<i32>} : memref<1x128xf32, #tpu.memory_space<vmem>>, vector<1x128xf32>,
    return
  }
  func.func @transform_0(%arg0: i32) -> (i32, i32) {
    %c0_i32 = arith.constant 0 : i32
    %c0_i32_0 = arith.constant 0 : i32
    return %arg0, %c0_i32 : i32, i32
  }
  func.func @transform_1(%arg0: i32) -> (i32, i32) {
    %c0_i32 = arith.constant 0 : i32
    %c0_i32_0 = arith.constant 0 : i32
    return %arg0, %c0_i32 : i32, i32
  }
  func.func @transform_2(%arg0: i32) -> (i32, i32) {
    %c0_i32 = arith.constant 0 : i32
    %c0_i32_0 = arith.constant 0 : i32
    return %c0_i32, %arg0 : i32, i32
  }
}

</mosaic_0001>

<llo_original>
// kernel: tpu_custom_call.1
$region0: #{tpu_custom_call.1}
  #allocation0 [shape = 'u32[]', space=smem, size = 0x4, offset = 0x4, fixed_abs, tag = 'smem constant byte address 0x4 - core index']
  #allocation1 [shape = 'u32[144,128]{1,0:T(1,128)}', space=vmem, size = 0x12000, scoped, tag = 'internal scratch']
  %s0 = inlined_call_operand.hbm [shape: f32[16,128], index: 0, kind: input, shape index: {}]
  %s1 = inlined_call_operand.hbm [shape: f32[16,128], index: 1, kind: input, shape index: {}]
  %s2 = inlined_call_operand.hbm [shape: f32[1,256], index: 2, kind: output, shape index: {}]
  %s3 = sld [smem:[#allocation0]]
  $region49: #{tpu_custom_call.1} parent=0
    _
  %s5 = ssub.s32 1, %s3
  %s6 = scalar_select 0, %s5, %s3
  $region1: #{tpu_custom_call.1} parent=0
    #allocation2 [shape = 'u8[8192]{0}', space=vmem, size = 0x2000, scoped, tag = 'input window, operand 0']
    #allocation3 [shape = 's32[2]{0}', space=sflag, size = 0x8, scoped, tag = 'scoped memory for tpu_custom_call.1']
    #allocation4 [shape = 's32[2]{0}', space=sflag, size = 0x8, scoped, tag = 'scoped memory for tpu_custom_call.1']
    #allocation5 [shape = 'u8[8192]{0}', space=vmem, size = 0x2000, scoped, tag = 'input window, operand 1']
    #allocation6 [shape = 's32[2]{0}', space=sflag, size = 0x8, scoped, tag = 'scoped memory for tpu_custom_call.1']
    #allocation7 [shape = 'u8[1024]{0}', space=vmem, size = 0x400, scoped, tag = 'output window, operand 0']
    %7 = vsyncpa [#allocation3], 0
    %s8 = scalar_lea.sflag [#allocation3], 1
    %9 = vsyncpa %s8, 0
    %10 = vsyncpa [#allocation6], 0
    %s11 = scalar_lea.sflag [#allocation6], 1
    %12 = vsyncpa %s11, 0
    %13 = vsyncpa [#allocation4], 0
    %s14 = scalar_lea.sflag [#allocation4], 1
    %15 = vsyncpa %s14, 0
    loop: start=0, step=1, limit=4
    $region2: #{tpu_custom_call.1} parent=1 // loop_pre_header
      _
    $region3: #{tpu_custom_call.1} parent=1 // loop_header
      %s17 = sphi 0, %s21
      %p18 = scmp.ge.s32.totalorder %s17, 4
      %s27 = sphi 0, %s29
      %s30 = sphi 0, %s27
      %s31 = sphi 0, %s30
      %s47 = sphi 0, %s31
      %s53 = sphi 0, %s55
      %s56 = sphi 0, %s53
      %s57 = sphi 0, %s56
      %s73 = sphi 0, %s57
      %s79 = sphi 0, %s81
      %s82 = sphi 0, %s79
      %s83 = sphi 0, %s82
      %s99 = sphi 0, %s83
    $region4: #{tpu_custom_call.1} parent=1 // loop_header_branch
      %20 = sbr.rel (%p18) target = $region8
    $region5: #{tpu_custom_call.1} parent=1 // loop_body
      %s22 = ssub.s32 %s17, 1
      %s23 = ssub.s32 %s17, 2
      %s24 = sadd.s32 %s17, 1
      %s25 = ssub.s32 %s17, %s24
      %p26 = scmp.eq.s32.totalorder %s25, 0
      %s28 = sadd.s32 %s27, 1
      %s29 = scalar_select %p26, %s27, %s28
      %p32 = pneg %p26
      %p33 = scmp.eq.s32.totalorder %s17, 1
      %p34 = por %p32, %p33
      %p35 = scmp.ne.s32.totalorder %s27, %s30
      %p36 = scmp.eq.s32.totalorder %s17, 0
      %p37 = por %p35, %p36
      %p38 = scmp.ne.s32.totalorder %s27, %s30
      %p39 = scmp.eq.s32.totalorder %s22, 1
      %p40 = por %p38, %p39
      %p41 = scmp.ne.s32.totalorder %s30, %s31
      %p42 = scmp.eq.s32.totalorder %s22, 0
      %p43 = por %p41, %p42
      %p44 = scmp.ne.s32.totalorder %s30, %s31
      %p45 = scmp.eq.s32.totalorder %s23, 1
      %p46 = por %p44, %p45
      %p48 = scmp.ne.s32.totalorder %s31, %s47
      %p49 = scmp.eq.s32.totalorder %s23, 0
      %p50 = por %p48, %p49
      %s51 = ssub.s32 %s17, %s24
      %p52 = scmp.eq.s32.totalorder %s51, 0
      %s54 = sadd.s32 %s53, 1
      %s55 = scalar_select %p52, %s53, %s54
      %p58 = pneg %p52
      %p59 = scmp.eq.s32.totalorder %s17, 1
      %p60 = por %p58, %p59
      %p61 = scmp.ne.s32.totalorder %s53, %s56
      %p62 = scmp.eq.s32.totalorder %s17, 0
      %p63 = por %p61, %p62
      %p64 = scmp.ne.s32.totalorder %s53, %s56
      %p65 = scmp.eq.s32.totalorder %s22, 1
      %p66 = por %p64, %p65
      %p67 = scmp.ne.s32.totalorder %s56, %s57
      %p68 = scmp.eq.s32.totalorder %s22, 0
      %p69 = por %p67, %p68
      %p70 = scmp.ne.s32.totalorder %s56, %s57
      %p71 = scmp.eq.s32.totalorder %s23, 1
      %p72 = por %p70, %p71
      %p74 = scmp.ne.s32.totalorder %s57, %s73
      %p75 = scmp.eq.s32.totalorder %s23, 0
      %p76 = por %p74, %p75
      %s77 = ssub.s32 %s17, %s24
      %p78 = scmp.eq.s32.totalorder %s77, 0
      %s80 = sadd.s32 %s79, 1
      %s81 = scalar_select %p78, %s79, %s80
      %p84 = pneg %p78
      %p85 = scmp.eq.s32.totalorder %s17, 1
      %p86 = por %p84, %p85
      %p87 = scmp.ne.s32.totalorder %s79, %s82
      %p88 = scmp.eq.s32.totalorder %s17, 0
      %p89 = por %p87, %p88
      %p90 = scmp.ne.s32.totalorder %s79, %s82
      %p91 = scmp.eq.s32.totalorder %s22, 1
      %p92 = por %p90, %p91
      %p93 = scmp.ne.s32.totalorder %s82, %s83
      %p94 = scmp.eq.s32.totalorder %s22, 0
      %p95 = por %p93, %p94
      %p96 = scmp.ne.s32.totalorder %s82, %s83
      %p97 = scmp.eq.s32.totalorder %s23, 1
      %p98 = por %p96, %p97
      %p100 = scmp.ne.s32.totalorder %s83, %s99
      %p101 = scmp.eq.s32.totalorder %s23, 0
      %p102 = por %p100, %p101
      %p103 = scmp.le.s32.totalorder 1, %s17
      %p104 = scmp.lt.s32.totalorder %s17, 3
      %p105 = pnand %p103, %p104
      %p106 = pneg %p105
      // Predicated region
      $region9: #{tpu_custom_call.1} parent=5 // pred_check
        _
      $region10: #{tpu_custom_call.1} parent=5 // pred_check_branch
        %108 = sbr.rel (%p105) target = $region12
      $region11: #{tpu_custom_call.1} parent=5 // pred_region
        %s109 = ssub.s32 %s17, 1
      $region12: #{tpu_custom_call.1} parent=5 // pred_fallthru
        _
      %p110 = scmp.lt.s32.totalorder %s17, 2
      // Predicated region
      $region13: #{tpu_custom_call.1} parent=5 // pred_check
        %p111 = pneg %p110
      $region14: #{tpu_custom_call.1} parent=5 // pred_check_branch
        %113 = sbr.rel (%p111) target = $region16
      $region15: #{tpu_custom_call.1} parent=5 // pred_region
        // Predicated region
        $region17: #{tpu_custom_call.1} parent=15 // pred_check
          %p114 = pneg %p37
        $region18: #{tpu_custom_call.1} parent=15 // pred_check_branch
          %116 = sbr.rel (%p114) target = $region20
        $region19: #{tpu_custom_call.1} parent=15 // pred_region
          %s117 = sand.u32 %s27, 1
          %s118 = scalar_lea.sflag [#allocation3], %s117
          %s119 = sand.u32 %s27, 1
          %s120 = smul.addr %s119, 8
          %s121 = scalar_lea.vmem [#allocation2], %s120
          %s123 = ssub.s32 128, 128
          %124 = vsyncadd %s118, %s123
          %s125 = smul.addr %s17, 128
          %s126 = scalar_lea.hbm %s0, %s125
          %s128 = sshll.u32 %s121, 4
          %s129 = int_to_ptr.vmem [resolvable:$true] %s128
          %131 = dma.hbm_to_vmem [thread:$0]  %s126, 128, %s129, %s118
        $region20: #{tpu_custom_call.1} parent=15 // pred_fallthru
          _
        // Predicated region
        $region21: #{tpu_custom_call.1} parent=15 // pred_check
          %p132 = pneg %p63
        $region22: #{tpu_custom_call.1} parent=15 // pred_check_branch
          %134 = sbr.rel (%p132) target = $region24
        $region23: #{tpu_custom_call.1} parent=15 // pred_region
          %s135 = sand.u32 %s53, 1
          %s136 = scalar_lea.sflag [#allocation6], %s135
          %s137 = sand.u32 %s53, 1
          %s138 = smul.addr %s137, 8
          %s139 = scalar_lea.vmem [#allocation5], %s138
          %s141 = ssub.s32 128, 128
          %142 = vsyncadd %s136, %s141
          %s143 = smul.addr %s17, 128
          %s144 = scalar_lea.hbm %s1, %s143
          %s146 = sshll.u32 %s139, 4
          %s147 = int_to_ptr.vmem [resolvable:$true] %s146
          %149 = dma.hbm_to_vmem [thread:$0]  %s144, 128, %s147, %s136
        $region24: #{tpu_custom_call.1} parent=15 // pred_fallthru
          _
      $region16: #{tpu_custom_call.1} parent=5 // pred_fallthru
        _
      %p150 = scmp.le.s32.totalorder 1, %s17
      %p151 = scmp.lt.s32.totalorder %s17, 3
      %p152 = pnand %p150, %p151
      %p153 = pneg %p152
      // Predicated region
      $region25: #{tpu_custom_call.1} parent=5 // pred_check
        _
      $region26: #{tpu_custom_call.1} parent=5 // pred_check_branch
        %155 = sbr.rel (%p152) target = $region28
      $region27: #{tpu_custom_call.1} parent=5 // pred_region
        %s156 = ssub.s32 %s17, 1
        %s157 = sand.u32 %s30, 1
        %s158 = scalar_lea.sflag [#allocation3], %s157
        %s159 = sand.u32 %s30, 1
        %s160 = smul.addr %s159, 8
        %s161 = scalar_lea.vmem [#allocation2], %s160
        // Predicated region
        $region29: #{tpu_custom_call.1} parent=27 // pred_check
          %p162 = pneg %p43
        $region30: #{tpu_custom_call.1} parent=27 // pred_check_branch
          %164 = sbr.rel (%p162) target = $region32
        $region31: #{tpu_custom_call.1} parent=27 // pred_region
          %165 = dma.done %s158, 128
        $region32: #{tpu_custom_call.1} parent=27 // pred_fallthru
          _
        %s166 = sand.u32 %s56, 1
        %s167 = scalar_lea.sflag [#allocation6], %s166
        %s168 = sand.u32 %s56, 1
        %s169 = smul.addr %s168, 8
        %s170 = scalar_lea.vmem [#allocation5], %s169
        // Predicated region
        $region33: #{tpu_custom_call.1} parent=27 // pred_check
          %p171 = pneg %p69
        $region34: #{tpu_custom_call.1} parent=27 // pred_check_branch
          %173 = sbr.rel (%p171) target = $region36
        $region35: #{tpu_custom_call.1} parent=27 // pred_region
          %174 = dma.done %s167, 128
        $region36: #{tpu_custom_call.1} parent=27 // pred_fallthru
          _
        %s175 = sand.u32 %s30, 1
        %s176 = scalar_lea.sflag [#allocation3], %s175
        %s177 = sand.u32 %s30, 1
        %s178 = smul.addr %s177, 8
        %s179 = scalar_lea.vmem [#allocation2], %s178
        %p180 = pneg %p43
        %p181 = pneg %p40
        %s182 = sand.u32 %s56, 1
        %s183 = scalar_lea.sflag [#allocation6], %s182
        %s184 = sand.u32 %s56, 1
        %s185 = smul.addr %s184, 8
        %s186 = scalar_lea.vmem [#allocation5], %s185
        %p187 = pneg %p69
        %p188 = pneg %p66
        %p189 = pneg %p95
        %p190 = pneg %p92
        %s191 = sand.u32 %s82, 1
        %s192 = scalar_lea.sflag [#allocation4], %s191
        %s193 = sand.u32 %s82, 1
        %s194 = scalar_lea.vmem [#allocation7], %s193
        %v195 = vld [vmem:[%s170] sm:$0xff]
        %v196 = vld [vmem:[%s161] sm:$0xff]
        %v197 = vsub.f32 %v195, %v196
        %v198 = vand.u32 2147483647, %v197
        %vm199 = vcmp.lt.f32.partialorder %v198, 10.0
        %v200 = vmul.f32 %v198, 0.5
        %v201 = vadd.f32 %v200, 1.0
        %v202 = vlog2.pop %v201
        %v203 = vmul.f32 %v202, 0.6931472
        %v204 = vmul.f32 -0.5, %v200
        %v205 = vadd.f32 %v204, 1.0
        %v206 = vmul.f32 %v205, %v200
        %v207 = vand.u32 2147483647, %v200
        %vm208 = vcmp.lt.f32.partialorder %v207, 0.0004427343
        %v209 = vsel %vm208, %v206, %v203
        %v210 = vmul.f32 %v209, 10.0
        %v211 = vsub.f32 %v198, -7.917595
        %v212 = vsel %vm199, %v210, %v211
        %v213 = vrot.slane %v212, 4
        %v214 = vadd.f32 %v212, %v213
        %v215 = vrot.slane %v214, 2
        %v216 = vadd.f32 %v214, %v215
        %v217 = vrot.slane %v216, 1
        %v218 = vadd.f32 %v216, %v217
        %219 = vst [vmem:[%s194] sm:$0x1] %v218
        %s220 = sand.u32 %s82, 1
        %s221 = scalar_lea.sflag [#allocation4], %s220
        %s222 = sand.u32 %s82, 1
        %s223 = scalar_lea.vmem [#allocation7], %s222
        // Predicated region
        $region37: #{tpu_custom_call.1} parent=27 // pred_check
          %p224 = pneg %p92
        $region38: #{tpu_custom_call.1} parent=27 // pred_check_branch
          %226 = sbr.rel (%p224) target = $region40
        $region39: #{tpu_custom_call.1} parent=27 // pred_region
          %s228 = ssub.s32 16, 16
          %229 = vsyncadd %s221, %s228
          %s230 = smul.addr %s22, 16
          %s231 = scalar_lea.hbm %s2, %s230
          %s233 = sshll.u32 %s223, 4
          %s234 = int_to_ptr.vmem [resolvable:$true] %s233
          %236 = dma.vmem_to_hbm [thread:$0]  %s234, 16, %s231, %s221
        $region40: #{tpu_custom_call.1} parent=27 // pred_fallthru
          _
      $region28: #{tpu_custom_call.1} parent=5 // pred_fallthru
        _
      %p237 = scmp.le.s32.totalorder 2, %s17
      // Predicated region
      $region41: #{tpu_custom_call.1} parent=5 // pred_check
        %p238 = pneg %p237
      $region42: #{tpu_custom_call.1} parent=5 // pred_check_branch
        %240 = sbr.rel (%p238) target = $region44
      $region43: #{tpu_custom_call.1} parent=5 // pred_region
        %s241 = ssub.s32 %s17, 2
        // Predicated region
        $region45: #{tpu_custom_call.1} parent=43 // pred_check
          %p242 = pneg %p98
        $region46: #{tpu_custom_call.1} parent=43 // pred_check_branch
          %244 = sbr.rel (%p242) target = $region48
        $region47: #{tpu_custom_call.1} parent=43 // pred_region
          %s245 = sand.u32 %s83, 1
          %s246 = scalar_lea.sflag [#allocation4], %s245
          %s247 = sand.u32 %s83, 1
          %s248 = scalar_lea.vmem [#allocation7], %s247
          %249 = dma.done %s246, 16
        $region48: #{tpu_custom_call.1} parent=43 // pred_fallthru
          _
      $region44: #{tpu_custom_call.1} parent=5 // pred_fallthru
        _
    $region6: #{tpu_custom_call.1} parent=1 // loop_footer
      %s21 = sadd.s32 1, %s17
    $region7: #{tpu_custom_call.1} parent=1 // loop_footer_branch
      %16 = sbr.rel target = $region3
    $region8: #{tpu_custom_call.1} parent=1 // loop_exit
      _
    %250 = vsyncpa [#allocation3], 1
    %s251 = scalar_lea.sflag [#allocation3], 1
    %252 = vsyncpa %s251, 1
    %253 = vsyncpa [#allocation6], 1
    %s254 = scalar_lea.sflag [#allocation6], 1
    %255 = vsyncpa %s254, 1
    %256 = vsyncpa [#allocation4], 1
    %s257 = scalar_lea.sflag [#allocation4], 1
    %258 = vsyncpa %s257, 1

</llo_original>
